<compile_context>
chip_gen: v6e
topology: v6e:2x2x1
jax: 0.10.0
libtpu: 0.0.40
codegen_flags: <defaults>
</compile_context>

<pallas_src>
import jax
import jax.numpy as jnp
from jax.experimental import pallas as pl
from jax.experimental.pallas import tpu as pltpu


def _conv1x1_cat_sigmoid_kernel(x_ref, w_ref, b_ref, o_ref):
    """Per-tile body.

    x_ref: VMEM (Cin, R, 128)  sublane-dense pixel tile of one batch element.
    w_ref: SMEM (Cout, Cin)    fused 1x1-conv weights (scalars).
    b_ref: SMEM (Cout,)        fused biases (scalars).
    o_ref: VMEM (Cout, R, 128) output tile.
    """
    cout, cin = w_ref.shape
    # Load each input-channel plane once (dense (R, 128) tiles), reuse for all Cout.
    xs = [x_ref[k] for k in range(cin)]
    for c in range(cout):
        acc = xs[0] * w_ref[c, 0]                     # VPU scalar-broadcast FMA
        for k in range(1, cin):
            acc = acc + xs[k] * w_ref[c, k]
        acc = acc + b_ref[c]                          # scalar bias add
        o_ref[c] = jax.nn.sigmoid(acc).astype(o_ref.dtype)   # EUP sigmoid, dense store


def _plan_row_tiling(hw, n_batch, cap_rows=256):
    """Pick (rows_per_tile, padded_total_rows) for a plane of `hw` pixels.

    A "row" is a 128-pixel lane group.  The tile's sublane dim must be a
    multiple of 8 or equal the full row extent.  cap_rows=256 -> 32K pixels
    (~1 MiB of f32 across 8 channels, ~2 MiB double-buffered).
    """
    rtot = pl.cdiv(hw, 128)
    if rtot <= cap_rows:
        r = rtot
        # v7x: keep >= 2 parallel grid steps even for batch-1 inputs.
        if n_batch == 1 and r >= 16 and r % 16 == 0:
            r //= 2
        rtot_pad = ((rtot + r - 1) // r) * r
        return r, rtot_pad
    r = cap_rows                       # multiple of 8 -> always a legal block dim
    rtot_pad = ((rtot + r - 1) // r) * r
    return r, rtot_pad


def fused_conv1x1_cat_sigmoid(x_nchw, w_cat, b_cat, *, cap_rows=256):
    """x_nchw: (N, Cin, H, W); w_cat: (Cout, Cin); b_cat: (Cout,)."""
    N, Cin, H, W = x_nchw.shape
    Cout = w_cat.shape[0]
    HW = H * W

    r_tile, rtot = _plan_row_tiling(HW, N, cap_rows)
    hw_pad = rtot * 128
    n_row_tiles = rtot // r_tile

    # Free view; zero-pad only if the plane is not a multiple of the tile.
    x_flat = x_nchw.reshape(N, Cin, HW)
    if hw_pad != HW:
        x_flat = jnp.pad(x_flat, ((0, 0), (0, 0), (0, hw_pad - HW)))
    x_v = x_flat.reshape(N, Cin, rtot, 128)

    out = pl.pallas_call(
        _conv1x1_cat_sigmoid_kernel,
        out_shape=jax.ShapeDtypeStruct((N, Cout, rtot, 128), x_nchw.dtype),
        grid=(N, n_row_tiles),
        in_specs=[
            # (Cin, r_tile, 128) dense tile per (batch, row-tile); batch squeezed.
            pl.BlockSpec((pl.Squeezed(), Cin, r_tile, 128),
                         lambda n, i: (n, 0, i, 0)),
            # Weights / biases are tiny scalar tables -> SMEM, no per-step DMA.
            pl.BlockSpec(memory_space=pltpu.MemorySpace.SMEM),
            pl.BlockSpec(memory_space=pltpu.MemorySpace.SMEM),
        ],
        out_specs=pl.BlockSpec((pl.Squeezed(), Cout, r_tile, 128),
                               lambda n, i: (n, 0, i, 0)),
        compiler_params=pltpu.CompilerParams(
            dimension_semantics=("parallel", "parallel")),
    )(x_v, w_cat, b_cat)

    out = out.reshape(N, Cout, hw_pad)
    if hw_pad != HW:
        out = out[:, :, :HW]
    return out.reshape(N, Cout, H, W)


def _init_params(key):
    """Deterministic init matching PyTorch Conv2d default (uniform +-1/sqrt(fan_in))."""
    k1, k2, k3, k4 = jax.random.split(key, 4)
    bound = 1.0 / jnp.sqrt(3.0)  # fan_in = Cin * 1 * 1 = 3
    w_conv = jax.random.uniform(k1, (1, 3), jnp.float32, -bound, bound)   # Conv2d(3,1,1)
    b_conv = jax.random.uniform(k2, (1,), jnp.float32, -bound, bound)
    w_conv2 = jax.random.uniform(k3, (4, 3), jnp.float32, -bound, bound)  # Conv2d(3,4,1)
    b_conv2 = jax.random.uniform(k4, (4,), jnp.float32, -bound, bound)
    # Fuse the two convs + channel concat into one (5, 3) weight / (5,) bias.
    w_cat = jnp.concatenate([w_conv, w_conv2], axis=0)
    b_cat = jnp.concatenate([b_conv, b_conv2], axis=0)
    return w_cat, b_cat


if __name__ == "__main__":
    key = jax.random.PRNGKey(0)
    k_x1, k_x2, k_x3, k_p = jax.random.split(key, 4)

    w_cat, b_cat = _init_params(k_p)

    # Shape from the original module spec: (1, 3, 64, 64) -> exercises the batch-1
    # split (two parallel row tiles).
    x_a = jax.random.normal(k_x1, (1, 3, 64, 64), jnp.float32)
    # Small batched shape: exercises the batch grid axis + full-extent row tile.
    x_b = jax.random.normal(k_x2, (2, 3, 16, 16), jnp.float32)
    # Plane not divisible by 128: exercises the bounded padding fallback.
    x_c = jax.random.normal(k_x3, (1, 3, 20, 20), jnp.float32)

    for x in (x_a, x_b, x_c):
        out = jax.block_until_ready(fused_conv1x1_cat_sigmoid(x, w_cat, b_cat))
        # Reference in plain JAX (1x1 conv == channel matmul) + sigmoid.
        ref = jax.nn.sigmoid(
            jnp.einsum("oc,nchw->nohw", w_cat, x) + b_cat[None, :, None, None]
        )
        assert out.shape == ref.shape
        assert jnp.allclose(out, ref, atol=1e-5, rtol=1e-5)

    print("KERNEL_OK")
</pallas_src>

<mosaic_0001>
module attributes {stable_mosaic.version = 11 : i64} {
  func.func @_conv1x1_cat_sigmoid_kernel(%arg0: i32, %arg1: i32, %arg2: memref<1x3x16x128xf32, #tpu.memory_space<vmem>>, %arg3: memref<5x3xf32, #tpu.memory_space<smem>>, %arg4: memref<5xf32, #tpu.memory_space<smem>>, %arg5: memref<1x5x16x128xf32, #tpu.memory_space<vmem>>) attributes {dimension_semantics = [#tpu.dimension_semantics<parallel>, #tpu.dimension_semantics<parallel>], iteration_bounds = array<i64: 1, 2>, scalar_prefetch = 0 : i64, scratch_operands = 0 : i64, tpu.core_type = #tpu.core_type<tc>, window_params = [{transform_indices = @transform_0, window_bounds = array<i64: 1, 3, 16, 128>}, {transform_indices = @transform_1, window_bounds = array<i64: 5, 3>}, {transform_indices = @transform_2, window_bounds = array<i64: 5>}, {transform_indices = @transform_3, window_bounds = array<i64: 1, 5, 16, 128>}]} {
    %c0 = arith.constant 0 : index
    %c0_0 = arith.constant 0 : index
    %c0_1 = arith.constant 0 : index
    %c0_2 = arith.constant 0 : index
    %0 = vector.load %arg2[%c0, %c0_0, %c0_1, %c0_2] : memref<1x3x16x128xf32, #tpu.memory_space<vmem>>, vector<1x1x16x128xf32>
    %1 = vector.shape_cast %0 : vector<1x1x16x128xf32> to vector<16x128xf32>
    %c0_3 = arith.constant 0 : index
    %c1 = arith.constant 1 : index
    %c0_4 = arith.constant 0 : index
    %c0_5 = arith.constant 0 : index
    %2 = vector.load %arg2[%c0_3, %c1, %c0_4, %c0_5] : memref<1x3x16x128xf32, #tpu.memory_space<vmem>>, vector<1x1x16x128xf32>
    %3 = vector.shape_cast %2 : vector<1x1x16x128xf32> to vector<16x128xf32>
    %c0_6 = arith.constant 0 : index
    %c2 = arith.constant 2 : index
    %c0_7 = arith.constant 0 : index
    %c0_8 = arith.constant 0 : index
    %4 = vector.load %arg2[%c0_6, %c2, %c0_7, %c0_8] : memref<1x3x16x128xf32, #tpu.memory_space<vmem>>, vector<1x1x16x128xf32>
    %5 = vector.shape_cast %4 : vector<1x1x16x128xf32> to vector<16x128xf32>
    %c0_9 = arith.constant 0 : index
    %c0_10 = arith.constant 0 : index
    %6 = memref.load %arg3[%c0_9, %c0_10] : memref<5x3xf32, #tpu.memory_space<smem>>
    %7 = vector.broadcast %6 : f32 to vector<16x128xf32>
    %8 = arith.mulf %1, %7 : vector<16x128xf32>
    %c0_11 = arith.constant 0 : index
    %c1_12 = arith.constant 1 : index
    %9 = memref.load %arg3[%c0_11, %c1_12] : memref<5x3xf32, #tpu.memory_space<smem>>
    %10 = vector.broadcast %9 : f32 to vector<16x128xf32>
    %11 = arith.mulf %3, %10 : vector<16x128xf32>
    %12 = arith.addf %8, %11 : vector<16x128xf32>
    %c0_13 = arith.constant 0 : index
    %c2_14 = arith.constant 2 : index
    %13 = memref.load %arg3[%c0_13, %c2_14] : memref<5x3xf32, #tpu.memory_space<smem>>
    %14 = vector.broadcast %13 : f32 to vector<16x128xf32>
    %15 = arith.mulf %5, %14 : vector<16x128xf32>
    %16 = arith.addf %12, %15 : vector<16x128xf32>
    %c0_15 = arith.constant 0 : index
    %17 = memref.load %arg4[%c0_15] : memref<5xf32, #tpu.memory_space<smem>>
    %18 = vector.broadcast %17 : f32 to vector<16x128xf32>
    %19 = arith.addf %16, %18 : vector<16x128xf32>
    %20 = arith.negf %19 : vector<16x128xf32>
    %21 = math.exp %20 : vector<16x128xf32>
    %cst = arith.constant 1.000000e+00 : f32
    %22 = vector.broadcast %cst : f32 to vector<16x128xf32>
    %23 = arith.addf %22, %21 : vector<16x128xf32>
    %24 = arith.divf %22, %23 : vector<16x128xf32>
    %c0_16 = arith.constant 0 : index
    %c0_17 = arith.constant 0 : index
    %c0_18 = arith.constant 0 : index
    %c0_19 = arith.constant 0 : index
    %25 = vector.load %arg5[%c0_16, %c0_17, %c0_18, %c0_19] : memref<1x5x16x128xf32, #tpu.memory_space<vmem>>, vector<1x1x16x128xf32>
    %26 = vector.shape_cast %25 : vector<1x1x16x128xf32> to vector<16x128xf32>
    %27 = vector.shape_cast %24 : vector<16x128xf32> to vector<1x1x16x128xf32>
    tpu.vector_store %arg5[%c0_16, %c0_17, %c0_18, %c0_19], %27 {strides = array<i32>} : memref<1x5x16x128xf32, #tpu.memory_space<vmem>>, vector<1x1x16x128xf32>,
    %c1_20 = arith.constant 1 : index
    %c0_21 = arith.constant 0 : index
    %28 = memref.load %arg3[%c1_20, %c0_21] : memref<5x3xf32, #tpu.memory_space<smem>>
    %29 = vector.broadcast %28 : f32 to vector<16x128xf32>
    %30 = arith.mulf %1, %29 : vector<16x128xf32>
    %c1_22 = arith.constant 1 : index
    %c1_23 = arith.constant 1 : index
    %31 = memref.load %arg3[%c1_22, %c1_23] : memref<5x3xf32, #tpu.memory_space<smem>>
    %32 = vector.broadcast %31 : f32 to vector<16x128xf32>
    %33 = arith.mulf %3, %32 : vector<16x128xf32>
    %34 = arith.addf %30, %33 : vector<16x128xf32>
    %c1_24 = arith.constant 1 : index
    %c2_25 = arith.constant 2 : index
    %35 = memref.load %arg3[%c1_24, %c2_25] : memref<5x3xf32, #tpu.memory_space<smem>>
    %36 = vector.broadcast %35 : f32 to vector<16x128xf32>
    %37 = arith.mulf %5, %36 : vector<16x128xf32>
    %38 = arith.addf %34, %37 : vector<16x128xf32>
    %c1_26 = arith.constant 1 : index
    %39 = memref.load %arg4[%c1_26] : memref<5xf32, #tpu.memory_space<smem>>
    %40 = vector.broadcast %39 : f32 to vector<16x128xf32>
    %41 = arith.addf %38, %40 : vector<16x128xf32>
    %42 = arith.negf %41 : vector<16x128xf32>
    %43 = math.exp %42 : vector<16x128xf32>
    %cst_27 = arith.constant 1.000000e+00 : f32
    %44 = vector.broadcast %cst_27 : f32 to vector<16x128xf32>
    %45 = arith.addf %44, %43 : vector<16x128xf32>
    %46 = arith.divf %44, %45 : vector<16x128xf32>
    %c0_28 = arith.constant 0 : index
    %c1_29 = arith.constant 1 : index
    %c0_30 = arith.constant 0 : index
    %c0_31 = arith.constant 0 : index
    %47 = vector.load %arg5[%c0_28, %c1_29, %c0_30, %c0_31] : memref<1x5x16x128xf32, #tpu.memory_space<vmem>>, vector<1x1x16x128xf32>
    %48 = vector.shape_cast %47 : vector<1x1x16x128xf32> to vector<16x128xf32>
    %49 = vector.shape_cast %46 : vector<16x128xf32> to vector<1x1x16x128xf32>
    tpu.vector_store %arg5[%c0_28, %c1_29, %c0_30, %c0_31], %49 {strides = array<i32>} : memref<1x5x16x128xf32, #tpu.memory_space<vmem>>, vector<1x1x16x128xf32>,
    %c2_32 = arith.constant 2 : index
    %c0_33 = arith.constant 0 : index
    %50 = memref.load %arg3[%c2_32, %c0_33] : memref<5x3xf32, #tpu.memory_space<smem>>
    %51 = vector.broadcast %50 : f32 to vector<16x128xf32>
    %52 = arith.mulf %1, %51 : vector<16x128xf32>
    %c2_34 = arith.constant 2 : index
    %c1_35 = arith.constant 1 : index
    %53 = memref.load %arg3[%c2_34, %c1_35] : memref<5x3xf32, #tpu.memory_space<smem>>
    %54 = vector.broadcast %53 : f32 to vector<16x128xf32>
    %55 = arith.mulf %3, %54 : vector<16x128xf32>
    %56 = arith.addf %52, %55 : vector<16x128xf32>
    %c2_36 = arith.constant 2 : index
    %c2_37 = arith.constant 2 : index
    %57 = memref.load %arg3[%c2_36, %c2_37] : memref<5x3xf32, #tpu.memory_space<smem>>
    %58 = vector.broadcast %57 : f32 to vector<16x128xf32>
    %59 = arith.mulf %5, %58 : vector<16x128xf32>
    %60 = arith.addf %56, %59 : vector<16x128xf32>
    %c2_38 = arith.constant 2 : index
    %61 = memref.load %arg4[%c2_38] : memref<5xf32, #tpu.memory_space<smem>>
    %62 = vector.broadcast %61 : f32 to vector<16x128xf32>
    %63 = arith.addf %60, %62 : vector<16x128xf32>
    %64 = arith.negf %63 : vector<16x128xf32>
    %65 = math.exp %64 : vector<16x128xf32>
    %cst_39 = arith.constant 1.000000e+00 : f32
    %66 = vector.broadcast %cst_39 : f32 to vector<16x128xf32>
    %67 = arith.addf %66, %65 : vector<16x128xf32>
    %68 = arith.divf %66, %67 : vector<16x128xf32>
    %c0_40 = arith.constant 0 : index
    %c2_41 = arith.constant 2 : index
    %c0_42 = arith.constant 0 : index
    %c0_43 = arith.constant 0 : index
    %69 = vector.load %arg5[%c0_40, %c2_41, %c0_42, %c0_43] : memref<1x5x16x128xf32, #tpu.memory_space<vmem>>, vector<1x1x16x128xf32>
    %70 = vector.shape_cast %69 : vector<1x1x16x128xf32> to vector<16x128xf32>
    %71 = vector.shape_cast %68 : vector<16x128xf32> to vector<1x1x16x128xf32>
    tpu.vector_store %arg5[%c0_40, %c2_41, %c0_42, %c0_43], %71 {strides = array<i32>} : memref<1x5x16x128xf32, #tpu.memory_space<vmem>>, vector<1x1x16x128xf32>,
    %c3 = arith.constant 3 : index
    %c0_44 = arith.constant 0 : index
    %72 = memref.load %arg3[%c3, %c0_44] : memref<5x3xf32, #tpu.memory_space<smem>>
    %73 = vector.broadcast %72 : f32 to vector<16x128xf32>
    %74 = arith.mulf %1, %73 : vector<16x128xf32>
    %c3_45 = arith.constant 3 : index
    %c1_46 = arith.constant 1 : index
    %75 = memref.load %arg3[%c3_45, %c1_46] : memref<5x3xf32, #tpu.memory_space<smem>>
    %76 = vector.broadcast %75 : f32 to vector<16x128xf32>
    %77 = arith.mulf %3, %76 : vector<16x128xf32>
    %78 = arith.addf %74, %77 : vector<16x128xf32>
    %c3_47 = arith.constant 3 : index
    %c2_48 = arith.constant 2 : index
    %79 = memref.load %arg3[%c3_47, %c2_48] : memref<5x3xf32, #tpu.memory_space<smem>>
    %80 = vector.broadcast %79 : f32 to vector<16x128xf32>
    %81 = arith.mulf %5, %80 : vector<16x128xf32>
    %82 = arith.addf %78, %81 : vector<16x128xf32>
    %c3_49 = arith.constant 3 : index
    %83 = memref.load %arg4[%c3_49] : memref<5xf32, #tpu.memory_space<smem>>
    %84 = vector.broadcast %83 : f32 to vector<16x128xf32>
    %85 = arith.addf %82, %84 : vector<16x128xf32>
    %86 = arith.negf %85 : vector<16x128xf32>
    %87 = math.exp %86 : vector<16x128xf32>
    %cst_50 = arith.constant 1.000000e+00 : f32
    %88 = vector.broadcast %cst_50 : f32 to vector<16x128xf32>
    %89 = arith.addf %88, %87 : vector<16x128xf32>
    %90 = arith.divf %88, %89 : vector<16x128xf32>
    %c0_51 = arith.constant 0 : index
    %c3_52 = arith.constant 3 : index
    %c0_53 = arith.constant 0 : index
    %c0_54 = arith.constant 0 : index
    %91 = vector.load %arg5[%c0_51, %c3_52, %c0_53, %c0_54] : memref<1x5x16x128xf32, #tpu.memory_space<vmem>>, vector<1x1x16x128xf32>
    %92 = vector.shape_cast %91 : vector<1x1x16x128xf32> to vector<16x128xf32>
    %93 = vector.shape_cast %90 : vector<16x128xf32> to vector<1x1x16x128xf32>
    tpu.vector_store %arg5[%c0_51, %c3_52, %c0_53, %c0_54], %93 {strides = array<i32>} : memref<1x5x16x128xf32, #tpu.memory_space<vmem>>, vector<1x1x16x128xf32>,
    %c4 = arith.constant 4 : index
    %c0_55 = arith.constant 0 : index
    %94 = memref.load %arg3[%c4, %c0_55] : memref<5x3xf32, #tpu.memory_space<smem>>
    %95 = vector.broadcast %94 : f32 to vector<16x128xf32>
    %96 = arith.mulf %1, %95 : vector<16x128xf32>
    %c4_56 = arith.constant 4 : index
    %c1_57 = arith.constant 1 : index
    %97 = memref.load %arg3[%c4_56, %c1_57] : memref<5x3xf32, #tpu.memory_space<smem>>
    %98 = vector.broadcast %97 : f32 to vector<16x128xf32>
    %99 = arith.mulf %3, %98 : vector<16x128xf32>
    %100 = arith.addf %96, %99 : vector<16x128xf32>
    %c4_58 = arith.constant 4 : index
    %c2_59 = arith.constant 2 : index
    %101 = memref.load %arg3[%c4_58, %c2_59] : memref<5x3xf32, #tpu.memory_space<smem>>
    %102 = vector.broadcast %101 : f32 to vector<16x128xf32>
    %103 = arith.mulf %5, %102 : vector<16x128xf32>
    %104 = arith.addf %100, %103 : vector<16x128xf32>
    %c4_60 = arith.constant 4 : index
    %105 = memref.load %arg4[%c4_60] : memref<5xf32, #tpu.memory_space<smem>>
    %106 = vector.broadcast %105 : f32 to vector<16x128xf32>
    %107 = arith.addf %104, %106 : vector<16x128xf32>
    %108 = arith.negf %107 : vector<16x128xf32>
    %109 = math.exp %108 : vector<16x128xf32>
    %cst_61 = arith.constant 1.000000e+00 : f32
    %110 = vector.broadcast %cst_61 : f32 to vector<16x128xf32>
    %111 = arith.addf %110, %109 : vector<16x128xf32>
    %112 = arith.divf %110, %111 : vector<16x128xf32>
    %c0_62 = arith.constant 0 : index
    %c4_63 = arith.constant 4 : index
    %c0_64 = arith.constant 0 : index
    %c0_65 = arith.constant 0 : index
    %113 = vector.load %arg5[%c0_62, %c4_63, %c0_64, %c0_65] : memref<1x5x16x128xf32, #tpu.memory_space<vmem>>, vector<1x1x16x128xf32>
    %114 = vector.shape_cast %113 : vector<1x1x16x128xf32> to vector<16x128xf32>
    %115 = vector.shape_cast %112 : vector<16x128xf32> to vector<1x1x16x128xf32>
    tpu.vector_store %arg5[%c0_62, %c4_63, %c0_64, %c0_65], %115 {strides = array<i32>} : memref<1x5x16x128xf32, #tpu.memory_space<vmem>>, vector<1x1x16x128xf32>,
    return
  }
  func.func @transform_0(%arg0: i32, %arg1: i32) -> (i32, i32, i32, i32) {
    %c0_i32 = arith.constant 0 : i32
    %c0_i32_0 = arith.constant 0 : i32
    %c0_i32_1 = arith.constant 0 : i32
    return %arg0, %c0_i32, %arg1, %c0_i32_0 : i32, i32, i32, i32
  }
  func.func @transform_1(%arg0: i32, %arg1: i32) -> (i32, i32) {
    %c0_i32 = arith.constant 0 : i32
    %c0_i32_0 = arith.constant 0 : i32
    %c0_i32_1 = arith.constant 0 : i32
    return %c0_i32, %c0_i32_0 : i32, i32
  }
  func.func @transform_2(%arg0: i32, %arg1: i32) -> i32 {
    %c0_i32 = arith.constant 0 : i32
    %c0_i32_0 = arith.constant 0 : i32
    return %c0_i32 : i32
  }
  func.func @transform_3(%arg0: i32, %arg1: i32) -> (i32, i32, i32, i32) {
    %c0_i32 = arith.constant 0 : i32
    %c0_i32_0 = arith.constant 0 : i32
    %c0_i32_1 = arith.constant 0 : i32
    return %arg0, %c0_i32, %arg1, %c0_i32_0 : i32, i32, i32, i32
  }
}

</mosaic_0001>

<llo_original>
// kernel: tpu_custom_call.1
$region0: #{tpu_custom_call.1}
  #allocation0 [shape = 'u32[]', space=smem, size = 0x4, offset = 0x4, fixed_abs, tag = 'smem constant byte address 0x4 - core index']
  #allocation1 [shape = 'u32[144,128]{1,0:T(1,128)}', space=vmem, size = 0x12000, scoped, tag = 'internal scratch']
  #allocation10 [shape = 's32[]', space=sflag, size = 0x4, offset = 0, fixed_abs, tag = 'sflag constant byte address 0x0 - dummy sync flag']
  #allocation12 [shape = 's32[]', space=sflag, size = 0x4, offset = 0, fixed_abs, tag = 'sflag constant byte address 0x0 - dummy sync flag']
  %s0 = inlined_call_operand.hbm [shape: f32[1,3,32,128], index: 0, kind: input, shape index: {}]
  %s1 = inlined_call_operand.vmem [shape: f32[5,3], index: 1, kind: input, shape index: {}]
  %s2 = inlined_call_operand.vmem [shape: f32[5], index: 2, kind: input, shape index: {}]
  %s3 = inlined_call_operand.hbm [shape: f32[1,5,32,128], index: 3, kind: output, shape index: {}]
  %s4 = sld [smem:[#allocation0]]
  $region57: #{tpu_custom_call.1} parent=0
    _
  %s6 = ssub.s32 1, %s4
  %s7 = scalar_select 0, %s6, %s4
  $region1: #{tpu_custom_call.1} parent=0
    #allocation2 [shape = 'u8[49152]{0}', space=vmem, size = 0xc000, scoped, tag = 'input window, operand 0']
    #allocation3 [shape = 's32[2]{0}', space=sflag, size = 0x8, scoped, tag = 'scoped memory for tpu_custom_call.1']
    #allocation4 [shape = 's32[2]{0}', space=sflag, size = 0x8, scoped, tag = 'scoped memory for tpu_custom_call.1']
    #allocation5 [shape = 's32[2]{0}', space=sflag, size = 0x8, scoped, tag = 'scoped memory for tpu_custom_call.1']
    #allocation6 [shape = 'u8[4096]{0}', space=smem, size = 0x1000, scoped, tag = 'input window, operand 1, single buffered']
    #allocation7 [shape = 'u8[512]{0}', space=smem, size = 0x200, scoped, tag = 'input window, operand 2, single buffered']
    #allocation8 [shape = 's32[1]{0}', space=sflag, size = 0x4, scoped, tag = 'scoped memory for tpu_custom_call.1']
    #allocation9 [shape = 'u8[81920]{0}', space=vmem, size = 0x14000, scoped, tag = 'output window, operand 0']
    %8 = vsyncpa [#allocation3], 0
    %s9 = scalar_lea.sflag [#allocation3], 1
    %10 = vsyncpa %s9, 0
    %11 = vsyncpa [#allocation5], 0
    %12 = vsyncpa [#allocation8], 0
    %13 = vsyncpa [#allocation4], 0
    %s14 = scalar_lea.sflag [#allocation4], 1
    %15 = vsyncpa %s14, 0
    loop: start=0, step=1, limit=4
    $region2: #{tpu_custom_call.1} parent=1 // loop_pre_header
      _
    $region3: #{tpu_custom_call.1} parent=1 // loop_header
      %s17 = sphi 0, %s21
      %p18 = scmp.ge.s32.totalorder %s17, 4
      %s24 = sphi 0, %s36
      %s25 = sphi 0, %s32
      %s26 = sphi 0, %s24
      %s27 = sphi 0, %s25
      %s28 = sphi 0, %s26
      %s29 = sphi 0, %s27
      %s41 = sphi 0, %s43
      %s44 = sphi 0, %s41
      %s45 = sphi 0, %s44
      %s61 = sphi 0, %s45
      %s65 = sphi 0, %s65
      %s67 = sphi 0, %s65
      %s68 = sphi 0, %s67
      %s82 = sphi 0, %s68
      %s86 = sphi 0, %s86
      %s88 = sphi 0, %s86
      %s89 = sphi 0, %s88
      %s103 = sphi 0, %s89
      %s111 = sphi 0, %s113
      %s114 = sphi 0, %s111
      %s115 = sphi 0, %s114
      %s131 = sphi 0, %s115
    $region4: #{tpu_custom_call.1} parent=1 // loop_header_branch
      %20 = sbr.rel (%p18) target = $region8
    $region5: #{tpu_custom_call.1} parent=1 // loop_body
      %s22 = ssub.s32 %s17, 1
      %s23 = ssub.s32 %s17, 2
      %s30 = sadd.s32 1, %s25
      %p31 = scmp.ge.s32.totalorder %s30, 2
      %s32 = scalar_select %p31, 0, %s30
      %s33 = sadd.s32 1, %s24
      %s34 = scalar_select %p31, %s33, %s24
      %p35 = scmp.ge.s32.totalorder %s34, 1
      %s36 = scalar_select %p35, 0, %s34
      %s37 = ssub.s32 %s24, %s36
      %s38 = ssub.s32 %s25, %s32
      %s39 = sor.u32 %s37, %s38
      %p40 = scmp.eq.s32.totalorder %s39, 0
      %s42 = sadd.s32 %s41, 1
      %s43 = scalar_select %p40, %s41, %s42
      %p46 = pneg %p40
      %p47 = scmp.eq.s32.totalorder %s17, 1
      %p48 = por %p46, %p47
      %p49 = scmp.ne.s32.totalorder %s41, %s44
      %p50 = scmp.eq.s32.totalorder %s17, 0
      %p51 = por %p49, %p50
      %p52 = scmp.ne.s32.totalorder %s41, %s44
      %p53 = scmp.eq.s32.totalorder %s22, 1
      %p54 = por %p52, %p53
      %p55 = scmp.ne.s32.totalorder %s44, %s45
      %p56 = scmp.eq.s32.totalorder %s22, 0
      %p57 = por %p55, %p56
      %p58 = scmp.ne.s32.totalorder %s44, %s45
      %p59 = scmp.eq.s32.totalorder %s23, 1
      %p60 = por %p58, %p59
      %p62 = scmp.ne.s32.totalorder %s45, %s61
      %p63 = scmp.eq.s32.totalorder %s23, 0
      %p64 = por %p62, %p63
      %s66 = sadd.s32 %s65, 1
      %p69 = scmp.eq.s32.totalorder %s17, 1
      %p70 = scmp.ne.s32.totalorder %s65, %s67
      %p71 = scmp.eq.s32.totalorder %s17, 0
      %p72 = por %p70, %p71
      %p73 = scmp.ne.s32.totalorder %s65, %s67
      %p74 = scmp.eq.s32.totalorder %s22, 1
      %p75 = por %p73, %p74
      %p76 = scmp.ne.s32.totalorder %s67, %s68
      %p77 = scmp.eq.s32.totalorder %s22, 0
      %p78 = por %p76, %p77
      %p79 = scmp.ne.s32.totalorder %s67, %s68
      %p80 = scmp.eq.s32.totalorder %s23, 1
      %p81 = por %p79, %p80
      %p83 = scmp.ne.s32.totalorder %s68, %s82
      %p84 = scmp.eq.s32.totalorder %s23, 0
      %p85 = por %p83, %p84
      %s87 = sadd.s32 %s86, 1
      %p90 = scmp.eq.s32.totalorder %s17, 1
      %p91 = scmp.ne.s32.totalorder %s86, %s88
      %p92 = scmp.eq.s32.totalorder %s17, 0
      %p93 = por %p91, %p92
      %p94 = scmp.ne.s32.totalorder %s86, %s88
      %p95 = scmp.eq.s32.totalorder %s22, 1
      %p96 = por %p94, %p95
      %p97 = scmp.ne.s32.totalorder %s88, %s89
      %p98 = scmp.eq.s32.totalorder %s22, 0
      %p99 = por %p97, %p98
      %p100 = scmp.ne.s32.totalorder %s88, %s89
      %p101 = scmp.eq.s32.totalorder %s23, 1
      %p102 = por %p100, %p101
      %p104 = scmp.ne.s32.totalorder %s89, %s103
      %p105 = scmp.eq.s32.totalorder %s23, 0
      %p106 = por %p104, %p105
      %s107 = ssub.s32 %s24, %s36
      %s108 = ssub.s32 %s25, %s32
      %s109 = sor.u32 %s107, %s108
      %p110 = scmp.eq.s32.totalorder %s109, 0
      %s112 = sadd.s32 %s111, 1
      %s113 = scalar_select %p110, %s111, %s112
      %p116 = pneg %p110
      %p117 = scmp.eq.s32.totalorder %s17, 1
      %p118 = por %p116, %p117
      %p119 = scmp.ne.s32.totalorder %s111, %s114
      %p120 = scmp.eq.s32.totalorder %s17, 0
      %p121 = por %p119, %p120
      %p122 = scmp.ne.s32.totalorder %s111, %s114
      %p123 = scmp.eq.s32.totalorder %s22, 1
      %p124 = por %p122, %p123
      %p125 = scmp.ne.s32.totalorder %s114, %s115
      %p126 = scmp.eq.s32.totalorder %s22, 0
      %p127 = por %p125, %p126
      %p128 = scmp.ne.s32.totalorder %s114, %s115
      %p129 = scmp.eq.s32.totalorder %s23, 1
      %p130 = por %p128, %p129
      %p132 = scmp.ne.s32.totalorder %s115, %s131
      %p133 = scmp.eq.s32.totalorder %s23, 0
      %p134 = por %p132, %p133
      %p135 = scmp.le.s32.totalorder 1, %s17
      %p136 = scmp.lt.s32.totalorder %s17, 3
      %p137 = pnand %p135, %p136
      %p138 = pneg %p137
      // Predicated region
      $region9: #{tpu_custom_call.1} parent=5 // pred_check
        _
      $region10: #{tpu_custom_call.1} parent=5 // pred_check_branch
        %140 = sbr.rel (%p137) target = $region12
      $region11: #{tpu_custom_call.1} parent=5 // pred_region
        %s141 = ssub.s32 %s17, 1
        // Predicated region
        $region13: #{tpu_custom_call.1} parent=11 // pred_check
          %p142 = pneg %p78
        $region14: #{tpu_custom_call.1} parent=11 // pred_check_branch
          %144 = sbr.rel (%p142) target = $region16
        $region15: #{tpu_custom_call.1} parent=11 // pred_region
          %s146 = ssub.s32 128, 128
          %147 = vsyncadd [#allocation5], %s146
          %s149 = sshll.u32 %s1, 4
          %s150 = int_to_ptr.vmem [resolvable:$true] %s149
          %152 = dma.vmem_to_smem %s150, 128, [#allocation6], [#allocation5]
        $region16: #{tpu_custom_call.1} parent=11 // pred_fallthru
          _
        // Predicated region
        $region17: #{tpu_custom_call.1} parent=11 // pred_check
          %p153 = pneg %p99
        $region18: #{tpu_custom_call.1} parent=11 // pred_check_branch
          %155 = sbr.rel (%p153) target = $region20
        $region19: #{tpu_custom_call.1} parent=11 // pred_region
          %s157 = ssub.s32 16, 16
          %158 = vsyncadd [#allocation8], %s157
          %s160 = sshll.u32 %s2, 4
          %s161 = int_to_ptr.vmem [resolvable:$true] %s160
          %163 = dma.vmem_to_smem %s161, 16, [#allocation7], [#allocation8]
        $region20: #{tpu_custom_call.1} parent=11 // pred_fallthru
          _
      $region12: #{tpu_custom_call.1} parent=5 // pred_fallthru
        _
      %p164 = scmp.lt.s32.totalorder %s17, 2
      // Predicated region
      $region21: #{tpu_custom_call.1} parent=5 // pred_check
        %p165 = pneg %p164
      $region22: #{tpu_custom_call.1} parent=5 // pred_check_branch
        %167 = sbr.rel (%p165) target = $region24
      $region23: #{tpu_custom_call.1} parent=5 // pred_region
        // Predicated region
        $region25: #{tpu_custom_call.1} parent=23 // pred_check
          %p168 = pneg %p51
        $region26: #{tpu_custom_call.1} parent=23 // pred_check_branch
          %170 = sbr.rel (%p168) target = $region28
        $region27: #{tpu_custom_call.1} parent=23 // pred_region
          #allocation11 [shape = 'u32[6]{0}', space=smem, size = 0x18, scoped, tag = 'DMA stride descriptor']
          %s171 = sand.u32 %s41, 1
          %s172 = scalar_lea.sflag [#allocation3], %s171
          %s173 = sand.u32 %s41, 1
          %s174 = smul.addr %s173, 48
          %s175 = scalar_lea.vmem [#allocation2], %s174
          %s176 = smul.u32 2, %s25
          %s178 = ssub.s32 768, 768
          %179 = vsyncadd %s172, %s178
          %s180 = smul.addr %s24, 12
          %s181 = sadd.s32 %s176, %s180
          %s182 = smul.addr %s181, 128
          %s183 = scalar_lea.hbm %s0, %s182
          %s185 = sshll.u32 1, 14
          %s186 = sxor.u32 4294967295, %s185
          %s188 = sld [smem:[#allocation0]]
          %s189 = sadd.s32 2, %s188
          %s191 = sshll.u32 7, 26
          %s192 = sxor.u32 4294967295, %s191
          %s193 = sand.u32 0, %s192
          %s194 = sshll.u32 %s189, 26
          %s195 = sor.u32 %s193, %s194
          %s196 = sshll.u32 %s175, 4
          %s197 = int_to_ptr.vmem [resolvable:$true] %s196
          %203 = sst [smem:[#allocation11]] 512
          %s204 = scalar_lea.smem [#allocation11], 1
          %205 = sst [smem:[%s204]] 256
          %s206 = scalar_lea.smem [#allocation11], 2
          %207 = sst [smem:[%s206]] 2
          %s208 = scalar_lea.smem [#allocation11], 3
          %209 = sst [smem:[%s208]] 128
          %s210 = scalar_lea.smem [#allocation11], 4
          %211 = sst [smem:[%s210]] 128
          %s212 = scalar_lea.smem [#allocation11], 5
          %213 = sst [smem:[%s212]] 8
          %215 = dma.general %s183, 768, %s197, %s172, 131072, [#allocation11], %s195, 0
        $region28: #{tpu_custom_call.1} parent=23 // pred_fallthru
          _
      $region24: #{tpu_custom_call.1} parent=5 // pred_fallthru
        _
      %p216 = scmp.le.s32.totalorder 1, %s17
      %p217 = scmp.lt.s32.totalorder %s17, 3
      %p218 = pnand %p216, %p217
      %p219 = pneg %p218
      // Predicated region
      $region29: #{tpu_custom_call.1} parent=5 // pred_check
        _
      $region30: #{tpu_custom_call.1} parent=5 // pred_check_branch
        %221 = sbr.rel (%p218) target = $region32
      $region31: #{tpu_custom_call.1} parent=5 // pred_region
        %s222 = ssub.s32 %s17, 1
        %s223 = sand.u32 %s44, 1
        %s224 = scalar_lea.sflag [#allocation3], %s223
        %s225 = sand.u32 %s44, 1
        %s226 = smul.addr %s225, 48
        %s227 = scalar_lea.vmem [#allocation2], %s226
        // Predicated region
        $region33: #{tpu_custom_call.1} parent=31 // pred_check
          %p228 = pneg %p57
        $region34: #{tpu_custom_call.1} parent=31 // pred_check_branch
          %230 = sbr.rel (%p228) target = $region36
        $region35: #{tpu_custom_call.1} parent=31 // pred_region
          %231 = dma.done %s224, 768
        $region36: #{tpu_custom_call.1} parent=31 // pred_fallthru
          _
        // Predicated region
        $region37: #{tpu_custom_call.1} parent=31 // pred_check
          %p232 = pneg %p78
        $region38: #{tpu_custom_call.1} parent=31 // pred_check_branch
          %234 = sbr.rel (%p232) target = $region40
        $region39: #{tpu_custom_call.1} parent=31 // pred_region
          %235 = dma.done [#allocation5], 128
        $region40: #{tpu_custom_call.1} parent=31 // pred_fallthru
          _
        // Predicated region
        $region41: #{tpu_custom_call.1} parent=31 // pred_check
          %p236 = pneg %p99
        $region42: #{tpu_custom_call.1} parent=31 // pred_check_branch
          %238 = sbr.rel (%p236) target = $region44
        $region43: #{tpu_custom_call.1} parent=31 // pred_region
          %239 = dma.done [#allocation8], 16
        $region44: #{tpu_custom_call.1} parent=31 // pred_fallthru
          _
        %240 = sfence
        %s241 = sand.u32 %s44, 1
        %s242 = scalar_lea.sflag [#allocation3], %s241
        %s243 = sand.u32 %s44, 1
        %s244 = smul.addr %s243, 48
        %s245 = scalar_lea.vmem [#allocation2], %s244
        %p246 = pneg %p57
        %p247 = pneg %p54
        %p248 = pneg %p78
        %p249 = pneg %p75
        %p250 = pneg %p99
        %p251 = pneg %p96
        %p252 = pneg %p127
        %p253 = pneg %p124
        %s254 = sand.u32 %s114, 1
        %s255 = scalar_lea.sflag [#allocation4], %s254
        %s256 = sand.u32 %s114, 1
        %s257 = smul.addr %s256, 80
        %s258 = scalar_lea.vmem [#allocation9], %s257
        %s259 = smul.u32 2, %s27
        %s260 = smul.u32 2, %s27
        %v261 = vld [vmem:[%s227] sm:$0xff]
        %v262 = vld [vmem:[%s227 + $0x8] sm:$0xff]
        %s263 = scalar_lea.vmem %s227, 16 [#allocation2]
        %v264 = vld [vmem:[%s263] sm:$0xff]
        %v265 = vld [vmem:[%s263 + $0x8] sm:$0xff]
        %s266 = scalar_lea.vmem %s227, 32 [#allocation2]
        %v267 = vld [vmem:[%s266] sm:$0xff]
        %v268 = vld [vmem:[%s266 + $0x8] sm:$0xff]
        %s269 = sld [smem:[#allocation6]]
        %v270 = vstv %s269
        %v271 = vmul.f32 %v261, %v270
        %v272 = vmul.f32 %v262, %v270
        %s273 = sld [smem:[#allocation6 + $0x1]]
        %v274 = vstv %s273
        %v275 = vmul.f32 %v264, %v274
        %v276 = vmul.f32 %v265, %v274
        %v277 = vadd.f32 %v271, %v275
        %v278 = vadd.f32 %v272, %v276
        %s279 = sld [smem:[#allocation6 + $0x2]]
        %v280 = vstv %s279
        %v281 = vmul.f32 %v267, %v280
        %v282 = vmul.f32 %v268, %v280
        %v283 = vadd.f32 %v277, %v281
        %v284 = vadd.f32 %v278, %v282
        %s285 = sld [smem:[#allocation7]]
        %v286 = vstv %s285
        %v287 = vadd.f32 %v283, %v286
        %v288 = vadd.f32 %v284, %v286
        %v289 = vxor.u32 %v287, 2147483648
        %v290 = vxor.u32 %v288, 2147483648
        %v291 = vmul.f32 %v289, 1.442695
        %v292 = vpow.pop %v291
        %v293 = vmul.f32 %v290, 1.442695
        %v294 = vpow.pop %v293
        %v295 = vadd.f32 %v292, 1.0
        %v296 = vadd.f32 %v294, 1.0
        %v297 = vrcp.pop %v295
        %v298 = vmul.f32 1.0, %v297
        %v299 = vrcp.pop %v296
        %v300 = vmul.f32 1.0, %v299
        %301 = vst [vmem:[%s258] sm:$0xff] %v298
        %302 = vst [vmem:[%s258 + $0x8] sm:$0xff] %v300
        %s303 = sld [smem:[#allocation6 + $0x80]]
        %v304 = vstv %s303
        %v305 = vmul.f32 %v261, %v304
        %v306 = vmul.f32 %v262, %v304
        %s307 = sld [smem:[#allocation6 + $0x81]]
        %v308 = vstv %s307
        %v309 = vmul.f32 %v264, %v308
        %v310 = vmul.f32 %v265, %v308
        %v311 = vadd.f32 %v305, %v309
        %v312 = vadd.f32 %v306, %v310
        %s313 = sld [smem:[#allocation6 + $0x82]]
        %v314 = vstv %s313
        %v315 = vmul.f32 %v267, %v314
        %v316 = vmul.f32 %v268, %v314
        %v317 = vadd.f32 %v311, %v315
        %v318 = vadd.f32 %v312, %v316
        %s319 = sld [smem:[#allocation7 + $0x1]]
        %v320 = vstv %s319
        %v321 = vadd.f32 %v317, %v320
        %v322 = vadd.f32 %v318, %v320
        %v323 = vxor.u32 %v321, 2147483648
        %v324 = vxor.u32 %v322, 2147483648
        %v325 = vmul.f32 %v323, 1.442695
        %v326 = vpow.pop %v325
        %v327 = vmul.f32 %v324, 1.442695
        %v328 = vpow.pop %v327
        %v329 = vadd.f32 %v326, 1.0
        %v330 = vadd.f32 %v328, 1.0
        %v331 = vrcp.pop %v329
        %v332 = vmul.f32 1.0, %v331
        %v333 = vrcp.pop %v330
        %v334 = vmul.f32 1.0, %v333
        %s335 = scalar_lea.vmem %s258, 16 [#allocation9]
        %336 = vst [vmem:[%s335] sm:$0xff] %v332
        %337 = vst [vmem:[%s335 + $0x8] sm:$0xff] %v334
        %s338 = sld [smem:[#allocation6 + $0x100]]
        %v339 = vstv %s338
        %v340 = vmul.f32 %v261, %v339
        %v341 = vmul.f32 %v262, %v339
        %s342 = sld [smem:[#allocation6 + $0x101]]
        %v343 = vstv %s342
        %v344 = vmul.f32 %v264, %v343
        %v345 = vmul.f32 %v265, %v343
        %v346 = vadd.f32 %v340, %v344
        %v347 = vadd.f32 %v341, %v345
        %s348 = sld [smem:[#allocation6 + $0x102]]
        %v349 = vstv %s348
        %v350 = vmul.f32 %v267, %v349
        %v351 = vmul.f32 %v268, %v349
        %v352 = vadd.f32 %v346, %v350
        %v353 = vadd.f32 %v347, %v351
        %s354 = sld [smem:[#allocation7 + $0x2]]
        %v355 = vstv %s354
        %v356 = vadd.f32 %v352, %v355
        %v357 = vadd.f32 %v353, %v355
        %v358 = vxor.u32 %v356, 2147483648
        %v359 = vxor.u32 %v357, 2147483648
        %v360 = vmul.f32 %v358, 1.442695
        %v361 = vpow.pop %v360
        %v362 = vmul.f32 %v359, 1.442695
        %v363 = vpow.pop %v362
        %v364 = vadd.f32 %v361, 1.0
        %v365 = vadd.f32 %v363, 1.0
        %v366 = vrcp.pop %v364
        %v367 = vmul.f32 1.0, %v366
        %v368 = vrcp.pop %v365
        %v369 = vmul.f32 1.0, %v368
        %s370 = scalar_lea.vmem %s258, 32 [#allocation9]
        %371 = vst [vmem:[%s370] sm:$0xff] %v367
        %372 = vst [vmem:[%s370 + $0x8] sm:$0xff] %v369
        %s373 = sld [smem:[#allocation6 + $0x180]]
        %v374 = vstv %s373
        %v375 = vmul.f32 %v261, %v374
        %v376 = vmul.f32 %v262, %v374
        %s377 = sld [smem:[#allocation6 + $0x181]]
        %v378 = vstv %s377
        %v379 = vmul.f32 %v264, %v378
        %v380 = vmul.f32 %v265, %v378
        %v381 = vadd.f32 %v375, %v379
        %v382 = vadd.f32 %v376, %v380
        %s383 = sld [smem:[#allocation6 + $0x182]]
        %v384 = vstv %s383
        %v385 = vmul.f32 %v267, %v384
        %v386 = vmul.f32 %v268, %v384
        %v387 = vadd.f32 %v381, %v385
        %v388 = vadd.f32 %v382, %v386
        %s389 = sld [smem:[#allocation7 + $0x3]]
        %v390 = vstv %s389
        %v391 = vadd.f32 %v387, %v390
        %v392 = vadd.f32 %v388, %v390
        %v393 = vxor.u32 %v391, 2147483648
        %v394 = vxor.u32 %v392, 2147483648
        %v395 = vmul.f32 %v393, 1.442695
        %v396 = vpow.pop %v395
        %v397 = vmul.f32 %v394, 1.442695
        %v398 = vpow.pop %v397
        %v399 = vadd.f32 %v396, 1.0
        %v400 = vadd.f32 %v398, 1.0
        %v401 = vrcp.pop %v399
        %v402 = vmul.f32 1.0, %v401
        %v403 = vrcp.pop %v400
        %v404 = vmul.f32 1.0, %v403
        %s405 = scalar_lea.vmem %s258, 48 [#allocation9]
        %406 = vst [vmem:[%s405] sm:$0xff] %v402
        %407 = vst [vmem:[%s405 + $0x8] sm:$0xff] %v404
        %s408 = sld [smem:[#allocation6 + $0x200]]
        %v409 = vstv %s408
        %v410 = vmul.f32 %v261, %v409
        %v411 = vmul.f32 %v262, %v409
        %s412 = sld [smem:[#allocation6 + $0x201]]
        %v413 = vstv %s412
        %v414 = vmul.f32 %v264, %v413
        %v415 = vmul.f32 %v265, %v413
        %v416 = vadd.f32 %v410, %v414
        %v417 = vadd.f32 %v411, %v415
        %s418 = sld [smem:[#allocation6 + $0x202]]
        %v419 = vstv %s418
        %v420 = vmul.f32 %v267, %v419
        %v421 = vmul.f32 %v268, %v419
        %v422 = vadd.f32 %v416, %v420
        %v423 = vadd.f32 %v417, %v421
        %s424 = sld [smem:[#allocation7 + $0x4]]
        %v425 = vstv %s424
        %v426 = vadd.f32 %v422, %v425
        %v427 = vadd.f32 %v423, %v425
        %v428 = vxor.u32 %v426, 2147483648
        %v429 = vxor.u32 %v427, 2147483648
        %v430 = vmul.f32 %v428, 1.442695
        %v431 = vpow.pop %v430
        %v432 = vmul.f32 %v429, 1.442695
        %v433 = vpow.pop %v432
        %v434 = vadd.f32 %v431, 1.0
        %v435 = vadd.f32 %v433, 1.0
        %v436 = vrcp.pop %v434
        %v437 = vmul.f32 1.0, %v436
        %v438 = vrcp.pop %v435
        %v439 = vmul.f32 1.0, %v438
        %s440 = scalar_lea.vmem %s258, 64 [#allocation9]
        %441 = vst [vmem:[%s440] sm:$0xff] %v437
        %442 = vst [vmem:[%s440 + $0x8] sm:$0xff] %v439
        %s443 = sand.u32 %s114, 1
        %s444 = scalar_lea.sflag [#allocation4], %s443
        %s445 = sand.u32 %s114, 1
        %s446 = smul.addr %s445, 80
        %s447 = scalar_lea.vmem [#allocation9], %s446
        // Predicated region
        $region45: #{tpu_custom_call.1} parent=31 // pred_check
          %p448 = pneg %p124
        $region46: #{tpu_custom_call.1} parent=31 // pred_check_branch
          %450 = sbr.rel (%p448) target = $region48
        $region47: #{tpu_custom_call.1} parent=31 // pred_region
          #allocation13 [shape = 'u32[6]{0}', space=smem, size = 0x18, scoped, tag = 'DMA stride descriptor']
          %s451 = smul.u32 2, %s27
          %s453 = ssub.s32 1280, 1280
          %454 = vsyncadd %s444, %s453
          %s455 = smul.addr %s26, 20
          %s456 = sadd.s32 %s451, %s455
          %s457 = smul.addr %s456, 128
          %s458 = scalar_lea.hbm %s3, %s457
          %s460 = sshll.u32 1, 14
          %s461 = sxor.u32 4294967295, %s460
          %s464 = sshll.u32 7, 18
          %s465 = sxor.u32 4294967295, %s464
          %s466 = sand.u32 0, %s465
          %s468 = sor.u32 %s466, 0
          %s469 = sshll.u32 %s447, 4
          %s470 = int_to_ptr.vmem [resolvable:$true] %s469
          %476 = sst [smem:[#allocation13]] 256
          %s477 = scalar_lea.smem [#allocation13], 1
          %478 = sst [smem:[%s477]] 512
          %s479 = scalar_lea.smem [#allocation13], 2
          %480 = sst [smem:[%s479]] 2
          %s481 = scalar_lea.smem [#allocation13], 3
          %482 = sst [smem:[%s481]] 128
          %s483 = scalar_lea.smem [#allocation13], 4
          %484 = sst [smem:[%s483]] 128
          %s485 = scalar_lea.smem [#allocation13], 5
          %486 = sst [smem:[%s485]] 8
          %488 = dma.general %s470, 1280, %s458, %s444, 131072, [#allocation13], %s468, 0
        $region48: #{tpu_custom_call.1} parent=31 // pred_fallthru
          _
      $region32: #{tpu_custom_call.1} parent=5 // pred_fallthru
        _
      %p489 = scmp.le.s32.totalorder 2, %s17
      // Predicated region
      $region49: #{tpu_custom_call.1} parent=5 // pred_check
        %p490 = pneg %p489
      $region50: #{tpu_custom_call.1} parent=5 // pred_check_branch
        %492 = sbr.rel (%p490) target = $region52
      $region51: #{tpu_custom_call.1} parent=5 // pred_region
        %s493 = ssub.s32 %s17, 2
        // Predicated region
        $region53: #{tpu_custom_call.1} parent=51 // pred_check
          %p494 = pneg %p130
        $region54: #{tpu_custom_call.1} parent=51 // pred_check_branch
          %496 = sbr.rel (%p494) target = $region56
        $region55: #{tpu_custom_call.1} parent=51 // pred_region
          %s497 = sand.u32 %s115, 1
          %s498 = scalar_lea.sflag [#allocation4], %s497
          %s499 = sand.u32 %s115, 1
          %s500 = smul.addr %s499, 80
          %s501 = scalar_lea.vmem [#allocation9], %s500
          %502 = dma.done %s498, 1280
        $region56: #{tpu_custom_call.1} parent=51 // pred_fallthru
          _
      $region52: #{tpu_custom_call.1} parent=5 // pred_fallthru
        _
    $region6: #{tpu_custom_call.1} parent=1 // loop_footer
      %s21 = sadd.s32 1, %s17
    $region7: #{tpu_custom_call.1} parent=1 // loop_footer_branch
      %16 = sbr.rel target = $region3
    $region8: #{tpu_custom_call.1} parent=1 // loop_exit
      _
    %503 = vsyncpa [#allocation3], 1
    %s504 = scalar_lea.sflag [#allocation3], 1
    %505 = vsyncpa %s504, 1
    %506 = vsyncpa [#allocation4], 1
    %s507 = scalar_lea.sflag [#allocation4], 1
    %508 = vsyncpa %s507, 1
    %509 = vsyncpa [#allocation5], 1
    %s510 = scalar_lea.sflag [#allocation5], 1
    %511 = vsyncpa %s510, 1
    %512 = vsyncpa [#allocation8], 1

</llo_original>
